<compile_context>
chip_gen: v6e
topology: v6e:2x2x1
jax: 0.10.0
libtpu: 0.0.40
codegen_flags: <defaults>
</compile_context>

<pallas_src>
import math

import jax
import jax.numpy as jnp
from jax.experimental import pallas as pl
from jax.experimental.pallas import tpu as pltpu

_LANES = 512          # lane-dense last dim, multiple of 128
_MAX_BLK_ROWS = 512   # 512 x 512 f32 = 1 MiB per block per array


def _round_up(x, m):
    return ((x + m - 1) // m) * m


def _c_relu_kernel(real_ref, imag_ref, real_out_ref, imag_out_ref):
    # Elementwise ReLU on both components (pure VPU work on VMEM tiles).
    real_out_ref[...] = jnp.maximum(real_ref[...], 0)
    imag_out_ref[...] = jnp.maximum(imag_ref[...], 0)


def c_relu(real, imag):
    """Apply C_ReLU: (relu(real), relu(imag)). real/imag must share shape+dtype."""
    assert real.shape == imag.shape and real.dtype == imag.dtype
    orig_shape = real.shape
    total = math.prod(orig_shape) if orig_shape else 1

    # Lane-dense slab: pad the flattened array so it reshapes to
    # (rows, _LANES) with rows an exact multiple of the row-block size.
    rows_needed = pl.cdiv(total, _LANES)
    blk_rows = min(_MAX_BLK_ROWS, _round_up(rows_needed, 8))  # (8,128)-aligned block
    rows = _round_up(rows_needed, blk_rows)
    padded_total = rows * _LANES

    real_flat = real.reshape(-1)
    imag_flat = imag.reshape(-1)
    if padded_total != total:
        pad = padded_total - total
        real_flat = jnp.pad(real_flat, (0, pad))
        imag_flat = jnp.pad(imag_flat, (0, pad))
    real2d = real_flat.reshape(rows, _LANES)
    imag2d = imag_flat.reshape(rows, _LANES)

    out_sds = jax.ShapeDtypeStruct((rows, _LANES), real.dtype)
    block = pl.BlockSpec(
        (blk_rows, _LANES), lambda i: (i, 0), memory_space=pltpu.MemorySpace.VMEM
    )

    real_o, imag_o = pl.pallas_call(
        _c_relu_kernel,
        out_shape=(out_sds, out_sds),
        grid=(rows // blk_rows,),
        in_specs=[block, block],
        out_specs=(block, block),
        # Donate the (temporary, padded/reshaped) input slabs as output buffers:
        # halves peak HBM footprint for large activations.
        input_output_aliases={0: 0, 1: 1},
        compiler_params=pltpu.CompilerParams(
            dimension_semantics=("parallel",),   # v7x: shard blocks over both TCs
            vmem_limit_bytes=32 * 1024 * 1024,   # safe on v5e/v6e/v7x; 8 MiB used
        ),
    )(real2d, imag2d)

    real_out = real_o.reshape(-1)[:total].reshape(orig_shape)
    imag_out = imag_o.reshape(-1)[:total].reshape(orig_shape)
    return real_out, imag_out


if __name__ == "__main__":
    key = jax.random.PRNGKey(0)
    k_real, k_imag = jax.random.split(key)

    # NCHW-like complex input: batch=2, channels=4, spatial=16x16
    x_real = jax.random.normal(k_real, (2, 4, 16, 16), dtype=jnp.float32)
    x_imag = jax.random.normal(k_imag, (2, 4, 16, 16), dtype=jnp.float32)

    out_real, out_imag = c_relu(x_real, x_imag)
    jax.block_until_ready((out_real, out_imag))

    # Verify against plain-JAX reference (F.relu on both components).
    ref_real = jnp.maximum(x_real, 0)
    ref_imag = jnp.maximum(x_imag, 0)
    assert out_real.shape == x_real.shape and out_imag.shape == x_imag.shape
    assert out_real.dtype == x_real.dtype and out_imag.dtype == x_imag.dtype
    assert jnp.allclose(out_real, ref_real)
    assert jnp.allclose(out_imag, ref_imag)

    print("KERNEL_OK")
</pallas_src>

<mosaic_0001>
module attributes {stable_mosaic.version = 11 : i64} {
  func.func @_c_relu_kernel(%arg0: i32, %arg1: memref<8x512xf32, #tpu.memory_space<vmem>>, %arg2: memref<8x512xf32, #tpu.memory_space<vmem>>, %arg3: memref<8x512xf32, #tpu.memory_space<vmem>>, %arg4: memref<8x512xf32, #tpu.memory_space<vmem>>) attributes {dimension_semantics = [#tpu.dimension_semantics<parallel>], iteration_bounds = array<i64: 1>, scalar_prefetch = 0 : i64, scratch_operands = 0 : i64, tpu.core_type = #tpu.core_type<tc>, window_params = [{transform_indices = @transform_0, window_bounds = array<i64: 8, 512>}, {transform_indices = @transform_1, window_bounds = array<i64: 8, 512>}, {transform_indices = @transform_2, window_bounds = array<i64: 8, 512>}, {transform_indices = @transform_3, window_bounds = array<i64: 8, 512>}]} {
    %c0 = arith.constant 0 : index
    %c0_0 = arith.constant 0 : index
    %0 = vector.load %arg1[%c0, %c0_0] : memref<8x512xf32, #tpu.memory_space<vmem>>, vector<8x512xf32>
    %cst = arith.constant 0.000000e+00 : f32
    %1 = vector.broadcast %cst : f32 to vector<8x512xf32>
    %2 = arith.maximumf %0, %1 : vector<8x512xf32>
    %c0_1 = arith.constant 0 : index
    %c0_2 = arith.constant 0 : index
    %3 = vector.load %arg3[%c0_1, %c0_2] : memref<8x512xf32, #tpu.memory_space<vmem>>, vector<8x512xf32>
    tpu.vector_store %arg3[%c0_1, %c0_2], %2 {strides = array<i32>} : memref<8x512xf32, #tpu.memory_space<vmem>>, vector<8x512xf32>,
    %c0_3 = arith.constant 0 : index
    %c0_4 = arith.constant 0 : index
    %4 = vector.load %arg2[%c0_3, %c0_4] : memref<8x512xf32, #tpu.memory_space<vmem>>, vector<8x512xf32>
    %cst_5 = arith.constant 0.000000e+00 : f32
    %5 = vector.broadcast %cst_5 : f32 to vector<8x512xf32>
    %6 = arith.maximumf %4, %5 : vector<8x512xf32>
    %c0_6 = arith.constant 0 : index
    %c0_7 = arith.constant 0 : index
    %7 = vector.load %arg4[%c0_6, %c0_7] : memref<8x512xf32, #tpu.memory_space<vmem>>, vector<8x512xf32>
    tpu.vector_store %arg4[%c0_6, %c0_7], %6 {strides = array<i32>} : memref<8x512xf32, #tpu.memory_space<vmem>>, vector<8x512xf32>,
    return
  }
  func.func @transform_0(%arg0: i32) -> (i32, i32) {
    %c0_i32 = arith.constant 0 : i32
    %c0_i32_0 = arith.constant 0 : i32
    return %arg0, %c0_i32 : i32, i32
  }
  func.func @transform_1(%arg0: i32) -> (i32, i32) {
    %c0_i32 = arith.constant 0 : i32
    %c0_i32_0 = arith.constant 0 : i32
    return %arg0, %c0_i32 : i32, i32
  }
  func.func @transform_2(%arg0: i32) -> (i32, i32) {
    %c0_i32 = arith.constant 0 : i32
    %c0_i32_0 = arith.constant 0 : i32
    return %arg0, %c0_i32 : i32, i32
  }
  func.func @transform_3(%arg0: i32) -> (i32, i32) {
    %c0_i32 = arith.constant 0 : i32
    %c0_i32_0 = arith.constant 0 : i32
    return %arg0, %c0_i32 : i32, i32
  }
}

</mosaic_0001>

<llo_original>
// kernel: tpu_custom_call.1
$region0: #{tpu_custom_call.1}
  #allocation0 [shape = 'u32[]', space=smem, size = 0x4, offset = 0x4, fixed_abs, tag = 'smem constant byte address 0x4 - core index']
  #allocation1 [shape = 'u32[144,128]{1,0:T(1,128)}', space=vmem, size = 0x12000, scoped, tag = 'internal scratch']
  %s0 = inlined_call_operand.hbm [shape: f32[8,512], index: 0, kind: input, shape index: {}, may-alias: {0,2}]
  %s1 = inlined_call_operand.hbm [shape: f32[8,512], index: 1, kind: input, shape index: {}, may-alias: {1,3}]
  %s2 = inlined_call_operand.hbm [shape: f32[8,512], index: 2, kind: output, shape index: {0}, may-alias: {0,2}]
  %s3 = inlined_call_operand.hbm [shape: f32[8,512], index: 3, kind: output, shape index: {1}, may-alias: {1,3}]
  %4 = xla_tuple %s2, %s3
  %s5 = sld [smem:[#allocation0]]
  $region34: #{tpu_custom_call.1} parent=0
    _
  %s7 = ssub.s32 1, %s5
  %s8 = scalar_select 0, %s7, %s5
  $region1: #{tpu_custom_call.1} parent=0
    #allocation2 [shape = 'u8[16384]{0}', space=vmem, size = 0x4000, scoped, tag = 'input window, operand 0, single buffered']
    #allocation3 [shape = 's32[1]{0}', space=sflag, size = 0x4, scoped, tag = 'scoped memory for tpu_custom_call.1']
    #allocation4 [shape = 's32[1]{0}', space=sflag, size = 0x4, scoped, tag = 'scoped memory for tpu_custom_call.1']
    #allocation5 [shape = 'u8[16384]{0}', space=vmem, size = 0x4000, scoped, tag = 'input window, operand 1, single buffered']
    #allocation6 [shape = 's32[1]{0}', space=sflag, size = 0x4, scoped, tag = 'scoped memory for tpu_custom_call.1']
    #allocation7 [shape = 'u8[16384]{0}', space=vmem, size = 0x4000, scoped, tag = 'output window, operand 0, single buffered']
    #allocation8 [shape = 'u8[16384]{0}', space=vmem, size = 0x4000, scoped, tag = 'output window, operand 1, single buffered']
    #allocation9 [shape = 's32[1]{0}', space=sflag, size = 0x4, scoped, tag = 'scoped memory for tpu_custom_call.1']
    %9 = vsyncpa [#allocation3], 0
    %10 = vsyncpa [#allocation6], 0
    %11 = vsyncpa [#allocation4], 0
    %12 = vsyncpa [#allocation9], 0
    // Predicated region
    $region2: #{tpu_custom_call.1} parent=1 // pred_check
      _
    $region3: #{tpu_custom_call.1} parent=1 // pred_check_branch
      %14 = sbr.rel (0) target = $region5
    $region4: #{tpu_custom_call.1} parent=1 // pred_region
      %s16 = ssub.s32 512, 512
      %17 = vsyncadd [#allocation3], %s16
      %s19 = sshll.u32 [#allocation2], 4
      %s20 = int_to_ptr.vmem [resolvable:$true] %s19
      %22 = dma.hbm_to_vmem [thread:$0]  %s0, 512, %s20, [#allocation3]
    $region5: #{tpu_custom_call.1} parent=1 // pred_fallthru
      _
    // Predicated region
    $region6: #{tpu_custom_call.1} parent=1 // pred_check
      _
    $region7: #{tpu_custom_call.1} parent=1 // pred_check_branch
      %24 = sbr.rel (0) target = $region9
    $region8: #{tpu_custom_call.1} parent=1 // pred_region
      %s26 = ssub.s32 512, 512
      %27 = vsyncadd [#allocation6], %s26
      %s29 = sshll.u32 [#allocation5], 4
      %s30 = int_to_ptr.vmem [resolvable:$true] %s29
      %32 = dma.hbm_to_vmem [thread:$0]  %s1, 512, %s30, [#allocation6]
    $region9: #{tpu_custom_call.1} parent=1 // pred_fallthru
      _
    // Predicated region
    $region10: #{tpu_custom_call.1} parent=1 // pred_check
      _
    $region11: #{tpu_custom_call.1} parent=1 // pred_check_branch
      %34 = sbr.rel (0) target = $region13
    $region12: #{tpu_custom_call.1} parent=1 // pred_region
      %35 = dma.done [#allocation3], 512
    $region13: #{tpu_custom_call.1} parent=1 // pred_fallthru
      _
    // Predicated region
    $region14: #{tpu_custom_call.1} parent=1 // pred_check
      _
    $region15: #{tpu_custom_call.1} parent=1 // pred_check_branch
      %37 = sbr.rel (0) target = $region17
    $region16: #{tpu_custom_call.1} parent=1 // pred_region
      %38 = dma.done [#allocation6], 512
    $region17: #{tpu_custom_call.1} parent=1 // pred_fallthru
      _
    %v39 = vld [vmem:[#allocation2] sm:$0xff]
    %v40 = vld [vmem:[#allocation2 + $0x8] sm:$0xff]
    %v41 = vld [vmem:[#allocation2 + $0x10] sm:$0xff]
    %v42 = vld [vmem:[#allocation2 + $0x18] sm:$0xff]
    %v43 = vmax.f32 %v39, 0.0
    %v44 = vmax.f32 %v40, 0.0
    %v45 = vmax.f32 %v41, 0.0
    %v46 = vmax.f32 %v42, 0.0
    %47 = vst [vmem:[#allocation7] sm:$0xff] %v43
    %48 = vst [vmem:[#allocation7 + $0x8] sm:$0xff] %v44
    %49 = vst [vmem:[#allocation7 + $0x10] sm:$0xff] %v45
    %50 = vst [vmem:[#allocation7 + $0x18] sm:$0xff] %v46
    %v51 = vld [vmem:[#allocation5] sm:$0xff]
    %v52 = vld [vmem:[#allocation5 + $0x8] sm:$0xff]
    %v53 = vld [vmem:[#allocation5 + $0x10] sm:$0xff]
    %v54 = vld [vmem:[#allocation5 + $0x18] sm:$0xff]
    %v55 = vmax.f32 %v51, 0.0
    %v56 = vmax.f32 %v52, 0.0
    %v57 = vmax.f32 %v53, 0.0
    %v58 = vmax.f32 %v54, 0.0
    %59 = vst [vmem:[#allocation8] sm:$0xff] %v55
    %60 = vst [vmem:[#allocation8 + $0x8] sm:$0xff] %v56
    %61 = vst [vmem:[#allocation8 + $0x10] sm:$0xff] %v57
    %62 = vst [vmem:[#allocation8 + $0x18] sm:$0xff] %v58
    // Predicated region
    $region18: #{tpu_custom_call.1} parent=1 // pred_check
      _
    $region19: #{tpu_custom_call.1} parent=1 // pred_check_branch
      %64 = sbr.rel (0) target = $region21
    $region20: #{tpu_custom_call.1} parent=1 // pred_region
      %s66 = ssub.s32 512, 512
      %67 = vsyncadd [#allocation4], %s66
      %s69 = sshll.u32 [#allocation7], 4
      %s70 = int_to_ptr.vmem [resolvable:$true] %s69
      %72 = dma.vmem_to_hbm [thread:$0]  %s70, 512, %s2, [#allocation4]
    $region21: #{tpu_custom_call.1} parent=1 // pred_fallthru
      _
    // Predicated region
    $region22: #{tpu_custom_call.1} parent=1 // pred_check
      _
    $region23: #{tpu_custom_call.1} parent=1 // pred_check_branch
      %74 = sbr.rel (0) target = $region25
    $region24: #{tpu_custom_call.1} parent=1 // pred_region
      %s76 = ssub.s32 512, 512
      %77 = vsyncadd [#allocation9], %s76
      %s79 = sshll.u32 [#allocation8], 4
      %s80 = int_to_ptr.vmem [resolvable:$true] %s79
      %82 = dma.vmem_to_hbm [thread:$0]  %s80, 512, %s3, [#allocation9]
    $region25: #{tpu_custom_call.1} parent=1 // pred_fallthru
      _
    // Predicated region
    $region26: #{tpu_custom_call.1} parent=1 // pred_check
      _
    $region27: #{tpu_custom_call.1} parent=1 // pred_check_branch
      %84 = sbr.rel (0) target = $region29
    $region28: #{tpu_custom_call.1} parent=1 // pred_region
      %85 = dma.done [#allocation4], 512
    $region29: #{tpu_custom_call.1} parent=1 // pred_fallthru
      _
    // Predicated region
    $region30: #{tpu_custom_call.1} parent=1 // pred_check
      _
    $region31: #{tpu_custom_call.1} parent=1 // pred_check_branch
      %87 = sbr.rel (0) target = $region33
    $region32: #{tpu_custom_call.1} parent=1 // pred_region
      %88 = dma.done [#allocation9], 512
    $region33: #{tpu_custom_call.1} parent=1 // pred_fallthru
      _
    %89 = vsyncpa [#allocation3], 1
    %90 = vsyncpa [#allocation6], 1
    %91 = vsyncpa [#allocation4], 1
    %92 = vsyncpa [#allocation9], 1

</llo_original>
